<compile_context>
chip_gen: v7x
topology: tpu7x:2x2x1
jax: 0.10.0
libtpu: 0.0.40
codegen_flags: <defaults>
</compile_context>

<pallas_src>
import jax
import jax.numpy as jnp
from jax.experimental import pallas as pl
from jax.experimental.pallas import tpu as pltpu


def _round_up(x, m):
    return ((x + m - 1) // m) * m


def _conv1x1_kernel(x_ref, w_ref, b_ref, o_ref):
    # x_ref: (Cin, thw)      activation tile, lane-dense over flattened spatial
    # w_ref: (Cin, Cout, 1)  f32 weights, per-k slice is a contiguous (Cout,1) row
    # b_ref: (Cout, 1)       f32 bias
    # o_ref: (Cout, thw)     output tile, lane-dense over flattened spatial
    cin = x_ref.shape[0]

    # k = 0 with the bias folded in (drops the separate full-tile bias add).
    acc = w_ref[0] * x_ref[0:1, :].astype(jnp.float32) + b_ref[...]
    # Remaining unrolled VPU FMAs: acc[c, :] += w[k, c] * x[k, :]
    for k in range(1, cin):
        acc = acc + w_ref[k] * x_ref[k:k + 1, :].astype(jnp.float32)

    o_ref[...] = acc.astype(o_ref.dtype)


def conv1x1(x_nchw, weight, bias, *, max_thw=65536):
    """1x1 convolution, semantics identical to nn.Conv2d(Cin, Cout, 1, bias=True).

    x_nchw: (N, Cin, H, W)
    weight: (Cout, Cin)   (PyTorch conv weight (Cout, Cin, 1, 1) squeezed)
    bias:   (Cout,)
    returns (N, Cout, H, W)
    """
    N, Cin, H, W = x_nchw.shape
    Cout = weight.shape[0]
    hw = H * W

    # Free contiguous reshape; no transposes, no padded copies anywhere.
    x3 = x_nchw.reshape(N, Cin, hw)

    # Spatial tile: multiple of 128 (or the full ragged extent when hw <= 128),
    # as large as VMEM comfortably allows to amortize per-grid-step overhead.
    if hw <= 128:
        thw = hw
    else:
        hw128 = pl.cdiv(hw, 128) * 128
        thw = min(_round_up(max_thw, 128), hw128)
        # v7x has 2 TensorCores; keep >= 2 "parallel" grid steps when possible.
        if N * pl.cdiv(hw, thw) < 2 and hw128 >= 256:
            thw = _round_up(pl.cdiv(hw128, 2), 128)
    n_hw = pl.cdiv(hw, thw)

    # Hoist casts/layout out of the kernel: weights transposed to (Cin, Cout, 1)
    # so each per-k read inside the kernel is a contiguous sublane row.
    w_kc1 = jnp.transpose(weight.astype(jnp.float32)).reshape(Cin, Cout, 1)
    b_c1 = bias.astype(jnp.float32).reshape(Cout, 1)

    dt = x3.dtype.itemsize
    cost = pl.CostEstimate(
        flops=2 * N * hw * Cin * Cout + N * hw * Cout,
        transcendentals=0,
        bytes_accessed=(N * Cin * hw * dt              # activations in
                        + w_kc1.size * 4 + b_c1.size * 4
                        + N * Cout * hw * dt),         # output out
    )

    # Double-buffered input + output blocks, plus generous headroom.
    block_bytes = 2 * (Cin + Cout) * thw * dt
    vmem_limit = int(min(64 * 2 ** 20, max(32 * 2 ** 20, 2 * block_bytes)))

    out3 = pl.pallas_call(
        _conv1x1_kernel,
        out_shape=jax.ShapeDtypeStruct((N, Cout, hw), x_nchw.dtype),
        grid_spec=pltpu.PrefetchScalarGridSpec(
            num_scalar_prefetch=0,
            grid=(N, n_hw),
            in_specs=[
                # batch dim squeezed out; kernel sees (Cin, thw)
                pl.BlockSpec((None, Cin, thw), lambda n, j: (n, 0, j)),
                # grid-invariant operands: same tiny block every step
                pl.BlockSpec((Cin, Cout, 1), lambda n, j: (0, 0, 0)),
                pl.BlockSpec((Cout, 1), lambda n, j: (0, 0)),
            ],
            out_specs=pl.BlockSpec((None, Cout, thw), lambda n, j: (n, 0, j)),
        ),
        compiler_params=pltpu.CompilerParams(
            dimension_semantics=("parallel", "parallel"),
            vmem_limit_bytes=vmem_limit,
        ),
        cost_estimate=cost,
    )(x3, w_kc1, b_c1)

    return out3.reshape(N, Cout, H, W)


if __name__ == "__main__":
    # Small shapes consistent with the module: N=2, Cin=4, Cout=8, H=W=16.
    N, Cin, Cout, H, W = 2, 4, 8, 16, 16

    key = jax.random.PRNGKey(0)
    kx, kw, kb = jax.random.split(key, 3)

    x = jax.random.normal(kx, (N, Cin, H, W), dtype=jnp.float32)
    # Deterministic parameter init (uniform in [-1/sqrt(Cin), 1/sqrt(Cin)],
    # matching PyTorch Conv2d default init range for a 1x1 kernel).
    limit = 1.0 / (Cin ** 0.5)
    weight = jax.random.uniform(kw, (Cout, Cin), jnp.float32, -limit, limit)
    bias = jax.random.uniform(kb, (Cout,), jnp.float32, -limit, limit)

    out = conv1x1(x, weight, bias)
    jax.block_until_ready(out)

    # Reference check in plain JAX (einsum over channels + bias).
    ref = jnp.einsum("nchw,oc->nohw", x, weight) + bias[None, :, None, None]
    assert out.shape == (N, Cout, H, W)
    assert jnp.allclose(out, ref, atol=1e-5, rtol=1e-5)

    # Ragged spatial size with hw <= 128 (block equals full extent).
    x2 = jax.random.normal(kx, (1, Cin, 10, 10), dtype=jnp.float32)
    out2 = conv1x1(x2, weight, bias)
    jax.block_until_ready(out2)
    ref2 = jnp.einsum("nchw,oc->nohw", x2, weight) + bias[None, :, None, None]
    assert out2.shape == (1, Cout, 10, 10)
    assert jnp.allclose(out2, ref2, atol=1e-5, rtol=1e-5)

    # Ragged spatial size with hw > 128 exercising the ragged-last-block
    # (masked writeback) path and the >=2-parallel-steps split for N=1.
    x3 = jax.random.normal(kx, (1, Cin, 18, 18), dtype=jnp.float32)
    out3 = conv1x1(x3, weight, bias)
    jax.block_until_ready(out3)
    ref3 = jnp.einsum("nchw,oc->nohw", x3, weight) + bias[None, :, None, None]
    assert out3.shape == (1, Cout, 18, 18)
    assert jnp.allclose(out3, ref3, atol=1e-5, rtol=1e-5)

    print("KERNEL_OK")
</pallas_src>

<mosaic_0001>
module attributes {stable_mosaic.version = 11 : i64} {
  func.func @_conv1x1_kernel(%arg0: i32, %arg1: i32, %arg2: memref<1x4x256xf32, #tpu.memory_space<vmem>>, %arg3: memref<4x8x1xf32, #tpu.memory_space<vmem>>, %arg4: memref<8x1xf32, #tpu.memory_space<vmem>>, %arg5: memref<1x8x256xf32, #tpu.memory_space<vmem>>) attributes {dimension_semantics = [#tpu.dimension_semantics<parallel>, #tpu.dimension_semantics<parallel>], iteration_bounds = array<i64: 2, 1>, scalar_prefetch = 0 : i64, scratch_operands = 0 : i64, tpu.core_type = #tpu.core_type<tc>, window_params = [{transform_indices = @transform_0, window_bounds = array<i64: 1, 4, 256>}, {pipeline_mode = #tpu.pipeline_mode<synchronous>, transform_indices = @transform_1, window_bounds = array<i64: 4, 8, 1>}, {pipeline_mode = #tpu.pipeline_mode<synchronous>, transform_indices = @transform_2, window_bounds = array<i64: 8, 1>}, {transform_indices = @transform_3, window_bounds = array<i64: 1, 8, 256>}]} {
    %c0 = arith.constant 0 : index
    %c0_0 = arith.constant 0 : index
    %c0_1 = arith.constant 0 : index
    %0 = vector.load %arg3[%c0, %c0_0, %c0_1] : memref<4x8x1xf32, #tpu.memory_space<vmem>>, vector<1x8x1xf32>
    %1 = vector.shape_cast %0 : vector<1x8x1xf32> to vector<8x1xf32>
    %c0_2 = arith.constant 0 : index
    %c0_3 = arith.constant 0 : index
    %c0_4 = arith.constant 0 : index
    %2 = vector.load %arg2[%c0_2, %c0_3, %c0_4] : memref<1x4x256xf32, #tpu.memory_space<vmem>>, vector<1x1x256xf32>
    %3 = vector.shape_cast %2 : vector<1x1x256xf32> to vector<1x256xf32>
    %4 = vector.broadcast %1 : vector<8x1xf32> to vector<8x256xf32>
    %5 = vector.broadcast %3 : vector<1x256xf32> to vector<8x256xf32>
    %6 = arith.mulf %4, %5 : vector<8x256xf32>
    %c0_5 = arith.constant 0 : index
    %c0_6 = arith.constant 0 : index
    %7 = vector.load %arg4[%c0_5, %c0_6] : memref<8x1xf32, #tpu.memory_space<vmem>>, vector<8x1xf32>
    %8 = vector.broadcast %7 : vector<8x1xf32> to vector<8x256xf32>
    %9 = arith.addf %6, %8 : vector<8x256xf32>
    %c1 = arith.constant 1 : index
    %c0_7 = arith.constant 0 : index
    %c0_8 = arith.constant 0 : index
    %10 = vector.load %arg3[%c1, %c0_7, %c0_8] : memref<4x8x1xf32, #tpu.memory_space<vmem>>, vector<1x8x1xf32>
    %11 = vector.shape_cast %10 : vector<1x8x1xf32> to vector<8x1xf32>
    %c0_9 = arith.constant 0 : index
    %c1_10 = arith.constant 1 : index
    %c0_11 = arith.constant 0 : index
    %12 = vector.load %arg2[%c0_9, %c1_10, %c0_11] : memref<1x4x256xf32, #tpu.memory_space<vmem>>, vector<1x1x256xf32>
    %13 = vector.shape_cast %12 : vector<1x1x256xf32> to vector<1x256xf32>
    %14 = vector.broadcast %11 : vector<8x1xf32> to vector<8x256xf32>
    %15 = vector.broadcast %13 : vector<1x256xf32> to vector<8x256xf32>
    %16 = arith.mulf %14, %15 : vector<8x256xf32>
    %17 = arith.addf %9, %16 : vector<8x256xf32>
    %c2 = arith.constant 2 : index
    %c0_12 = arith.constant 0 : index
    %c0_13 = arith.constant 0 : index
    %18 = vector.load %arg3[%c2, %c0_12, %c0_13] : memref<4x8x1xf32, #tpu.memory_space<vmem>>, vector<1x8x1xf32>
    %19 = vector.shape_cast %18 : vector<1x8x1xf32> to vector<8x1xf32>
    %c0_14 = arith.constant 0 : index
    %c2_15 = arith.constant 2 : index
    %c0_16 = arith.constant 0 : index
    %20 = vector.load %arg2[%c0_14, %c2_15, %c0_16] : memref<1x4x256xf32, #tpu.memory_space<vmem>>, vector<1x1x256xf32>
    %21 = vector.shape_cast %20 : vector<1x1x256xf32> to vector<1x256xf32>
    %22 = vector.broadcast %19 : vector<8x1xf32> to vector<8x256xf32>
    %23 = vector.broadcast %21 : vector<1x256xf32> to vector<8x256xf32>
    %24 = arith.mulf %22, %23 : vector<8x256xf32>
    %25 = arith.addf %17, %24 : vector<8x256xf32>
    %c3 = arith.constant 3 : index
    %c0_17 = arith.constant 0 : index
    %c0_18 = arith.constant 0 : index
    %26 = vector.load %arg3[%c3, %c0_17, %c0_18] : memref<4x8x1xf32, #tpu.memory_space<vmem>>, vector<1x8x1xf32>
    %27 = vector.shape_cast %26 : vector<1x8x1xf32> to vector<8x1xf32>
    %c0_19 = arith.constant 0 : index
    %c3_20 = arith.constant 3 : index
    %c0_21 = arith.constant 0 : index
    %28 = vector.load %arg2[%c0_19, %c3_20, %c0_21] : memref<1x4x256xf32, #tpu.memory_space<vmem>>, vector<1x1x256xf32>
    %29 = vector.shape_cast %28 : vector<1x1x256xf32> to vector<1x256xf32>
    %30 = vector.broadcast %27 : vector<8x1xf32> to vector<8x256xf32>
    %31 = vector.broadcast %29 : vector<1x256xf32> to vector<8x256xf32>
    %32 = arith.mulf %30, %31 : vector<8x256xf32>
    %33 = arith.addf %25, %32 : vector<8x256xf32>
    %c0_22 = arith.constant 0 : index
    %c0_23 = arith.constant 0 : index
    %c0_24 = arith.constant 0 : index
    %34 = vector.load %arg5[%c0_22, %c0_23, %c0_24] : memref<1x8x256xf32, #tpu.memory_space<vmem>>, vector<1x8x256xf32>
    %35 = vector.shape_cast %34 : vector<1x8x256xf32> to vector<8x256xf32>
    %36 = vector.shape_cast %33 : vector<8x256xf32> to vector<1x8x256xf32>
    tpu.vector_store %arg5[%c0_22, %c0_23, %c0_24], %36 {strides = array<i32>} : memref<1x8x256xf32, #tpu.memory_space<vmem>>, vector<1x8x256xf32>,
    return
  }
  func.func @transform_0(%arg0: i32, %arg1: i32) -> (i32, i32, i32) {
    %c0_i32 = arith.constant 0 : i32
    %c0_i32_0 = arith.constant 0 : i32
    return %arg0, %c0_i32, %arg1 : i32, i32, i32
  }
  func.func @transform_1(%arg0: i32, %arg1: i32) -> (i32, i32, i32) {
    %c0_i32 = arith.constant 0 : i32
    %c0_i32_0 = arith.constant 0 : i32
    %c0_i32_1 = arith.constant 0 : i32
    %c0_i32_2 = arith.constant 0 : i32
    return %c0_i32, %c0_i32_0, %c0_i32_1 : i32, i32, i32
  }
  func.func @transform_2(%arg0: i32, %arg1: i32) -> (i32, i32) {
    %c0_i32 = arith.constant 0 : i32
    %c0_i32_0 = arith.constant 0 : i32
    %c0_i32_1 = arith.constant 0 : i32
    return %c0_i32, %c0_i32_0 : i32, i32
  }
  func.func @transform_3(%arg0: i32, %arg1: i32) -> (i32, i32, i32) {
    %c0_i32 = arith.constant 0 : i32
    %c0_i32_0 = arith.constant 0 : i32
    return %arg0, %c0_i32, %arg1 : i32, i32, i32
  }
}

</mosaic_0001>

<llo_original>
// kernel: tpu_custom_call.1
$region0: #{tpu_custom_call.1}
  #allocation0 [shape = 'u32[]', space=smem, size = 0x4, offset = 0x4, fixed_abs, tag = 'smem constant byte address 0x4 - core index']
  #allocation1 [shape = 'u32[144,128]{1,0:T(1,128)}', space=vmem, size = 0x12000, scoped, tag = 'internal scratch']
  %s0 = inlined_call_operand.vmem [shape: f32[2,4,256], index: 0, kind: input, shape index: {}]
  %s1 = inlined_call_operand.vmem [shape: f32[4,8,1], index: 1, kind: input, shape index: {}]
  %s2 = inlined_call_operand.vmem [shape: f32[8,1], index: 2, kind: input, shape index: {}]
  %s3 = inlined_call_operand.hbm [shape: f32[2,8,256], index: 3, kind: output, shape index: {}]
  %s4 = sld [smem:[#allocation0]]
  $region45: #{tpu_custom_call.1} parent=0
    _
  %s6 = ssub.s32 1, %s4
  %s7 = scalar_select 0, %s6, %s4
  $region1: #{tpu_custom_call.1} parent=0
    #allocation2 [shape = 'u8[16384]{0}', space=vmem, size = 0x4000, scoped, tag = 'output window, operand 0']
    #allocation3 [shape = 's32[2]{0}', space=sflag, size = 0x8, scoped, tag = 'scoped memory for tpu_custom_call.1']
    %8 = vsyncpa [#allocation3], 0
    %s9 = scalar_lea.sflag [#allocation3], 1
    %10 = vsyncpa %s9, 0
    loop: start=0, step=1, limit=4
    $region2: #{tpu_custom_call.1} parent=1 // loop_pre_header
      _
    $region3: #{tpu_custom_call.1} parent=1 // loop_header
      %s12 = sphi 0, %s16
      %p13 = scmp.ge.s32.totalorder %s12, 4
      %s19 = sphi 0, %s31
      %s20 = sphi 0, %s27
      %s21 = sphi 0, %s19
      %s22 = sphi 0, %s20
      %s23 = sphi 0, %s21
      %s24 = sphi 0, %s22
      %s36 = sphi 0, %s38
      %s39 = sphi 0, %s36
      %s40 = sphi 0, %s39
      %s56 = sphi 0, %s40
      %s60 = sphi 0, %s60
      %s62 = sphi 0, %s60
      %s63 = sphi 0, %s62
      %s77 = sphi 0, %s63
      %s81 = sphi 0, %s81
      %s83 = sphi 0, %s81
      %s84 = sphi 0, %s83
      %s98 = sphi 0, %s84
      %s106 = sphi 0, %s108
      %s109 = sphi 0, %s106
      %s110 = sphi 0, %s109
      %s126 = sphi 0, %s110
    $region4: #{tpu_custom_call.1} parent=1 // loop_header_branch
      %15 = sbr.rel (%p13) target = $region8
    $region5: #{tpu_custom_call.1} parent=1 // loop_body
      %s17 = ssub.s32 %s12, 1
      %s18 = ssub.s32 %s12, 2
      %s25 = sadd.s32 1, %s20
      %p26 = scmp.ge.s32.totalorder %s25, 1
      %s27 = scalar_select %p26, 0, %s25
      %s28 = sadd.s32 1, %s19
      %s29 = scalar_select %p26, %s28, %s19
      %p30 = scmp.ge.s32.totalorder %s29, 2
      %s31 = scalar_select %p30, 0, %s29
      %s32 = ssub.s32 %s19, %s31
      %s33 = ssub.s32 %s20, %s27
      %s34 = sor.u32 %s32, %s33
      %p35 = scmp.eq.s32.totalorder %s34, 0
      %s37 = sadd.s32 %s36, 1
      %s38 = scalar_select %p35, %s36, %s37
      %p41 = pneg %p35
      %p42 = scmp.eq.s32.totalorder %s12, 1
      %p43 = por %p41, %p42
      %p44 = scmp.ne.s32.totalorder %s36, %s39
      %p45 = scmp.eq.s32.totalorder %s12, 0
      %p46 = por %p44, %p45
      %p47 = scmp.ne.s32.totalorder %s36, %s39
      %p48 = scmp.eq.s32.totalorder %s17, 1
      %p49 = por %p47, %p48
      %p50 = scmp.ne.s32.totalorder %s39, %s40
      %p51 = scmp.eq.s32.totalorder %s17, 0
      %p52 = por %p50, %p51
      %p53 = scmp.ne.s32.totalorder %s39, %s40
      %p54 = scmp.eq.s32.totalorder %s18, 1
      %p55 = por %p53, %p54
      %p57 = scmp.ne.s32.totalorder %s40, %s56
      %p58 = scmp.eq.s32.totalorder %s18, 0
      %p59 = por %p57, %p58
      %s61 = sadd.s32 %s60, 1
      %p64 = scmp.eq.s32.totalorder %s12, 1
      %p65 = scmp.ne.s32.totalorder %s60, %s62
      %p66 = scmp.eq.s32.totalorder %s12, 0
      %p67 = por %p65, %p66
      %p68 = scmp.ne.s32.totalorder %s60, %s62
      %p69 = scmp.eq.s32.totalorder %s17, 1
      %p70 = por %p68, %p69
      %p71 = scmp.ne.s32.totalorder %s62, %s63
      %p72 = scmp.eq.s32.totalorder %s17, 0
      %p73 = por %p71, %p72
      %p74 = scmp.ne.s32.totalorder %s62, %s63
      %p75 = scmp.eq.s32.totalorder %s18, 1
      %p76 = por %p74, %p75
      %p78 = scmp.ne.s32.totalorder %s63, %s77
      %p79 = scmp.eq.s32.totalorder %s18, 0
      %p80 = por %p78, %p79
      %s82 = sadd.s32 %s81, 1
      %p85 = scmp.eq.s32.totalorder %s12, 1
      %p86 = scmp.ne.s32.totalorder %s81, %s83
      %p87 = scmp.eq.s32.totalorder %s12, 0
      %p88 = por %p86, %p87
      %p89 = scmp.ne.s32.totalorder %s81, %s83
      %p90 = scmp.eq.s32.totalorder %s17, 1
      %p91 = por %p89, %p90
      %p92 = scmp.ne.s32.totalorder %s83, %s84
      %p93 = scmp.eq.s32.totalorder %s17, 0
      %p94 = por %p92, %p93
      %p95 = scmp.ne.s32.totalorder %s83, %s84
      %p96 = scmp.eq.s32.totalorder %s18, 1
      %p97 = por %p95, %p96
      %p99 = scmp.ne.s32.totalorder %s84, %s98
      %p100 = scmp.eq.s32.totalorder %s18, 0
      %p101 = por %p99, %p100
      %s102 = ssub.s32 %s19, %s31
      %s103 = ssub.s32 %s20, %s27
      %s104 = sor.u32 %s102, %s103
      %p105 = scmp.eq.s32.totalorder %s104, 0
      %s107 = sadd.s32 %s106, 1
      %s108 = scalar_select %p105, %s106, %s107
      %p111 = pneg %p105
      %p112 = scmp.eq.s32.totalorder %s12, 1
      %p113 = por %p111, %p112
      %p114 = scmp.ne.s32.totalorder %s106, %s109
      %p115 = scmp.eq.s32.totalorder %s12, 0
      %p116 = por %p114, %p115
      %p117 = scmp.ne.s32.totalorder %s106, %s109
      %p118 = scmp.eq.s32.totalorder %s17, 1
      %p119 = por %p117, %p118
      %p120 = scmp.ne.s32.totalorder %s109, %s110
      %p121 = scmp.eq.s32.totalorder %s17, 0
      %p122 = por %p120, %p121
      %p123 = scmp.ne.s32.totalorder %s109, %s110
      %p124 = scmp.eq.s32.totalorder %s18, 1
      %p125 = por %p123, %p124
      %p127 = scmp.ne.s32.totalorder %s110, %s126
      %p128 = scmp.eq.s32.totalorder %s18, 0
      %p129 = por %p127, %p128
      %p130 = scmp.le.s32.totalorder 1, %s12
      %p131 = scmp.lt.s32.totalorder %s12, 3
      %p132 = pnand %p130, %p131
      %p133 = pneg %p132
      // Predicated region
      $region9: #{tpu_custom_call.1} parent=5 // pred_check
        _
      $region10: #{tpu_custom_call.1} parent=5 // pred_check_branch
        %135 = sbr.rel (%p132) target = $region12
      $region11: #{tpu_custom_call.1} parent=5 // pred_region
        %s136 = ssub.s32 %s12, 1
        // Predicated region
        $region13: #{tpu_custom_call.1} parent=11 // pred_check
          %p137 = pneg %p73
        $region14: #{tpu_custom_call.1} parent=11 // pred_check_branch
          %139 = sbr.rel (%p137) target = $region16
        $region15: #{tpu_custom_call.1} parent=11 // pred_region
          _
        $region16: #{tpu_custom_call.1} parent=11 // pred_fallthru
          _
        // Predicated region
        $region17: #{tpu_custom_call.1} parent=11 // pred_check
          %p140 = pneg %p94
        $region18: #{tpu_custom_call.1} parent=11 // pred_check_branch
          %142 = sbr.rel (%p140) target = $region20
        $region19: #{tpu_custom_call.1} parent=11 // pred_region
          _
        $region20: #{tpu_custom_call.1} parent=11 // pred_fallthru
          _
      $region12: #{tpu_custom_call.1} parent=5 // pred_fallthru
        _
      %p143 = scmp.lt.s32.totalorder %s12, 2
      // Predicated region
      $region21: #{tpu_custom_call.1} parent=5 // pred_check
        %p144 = pneg %p143
      $region22: #{tpu_custom_call.1} parent=5 // pred_check_branch
        %146 = sbr.rel (%p144) target = $region24
      $region23: #{tpu_custom_call.1} parent=5 // pred_region
        // Predicated region
        $region25: #{tpu_custom_call.1} parent=23 // pred_check
          %p147 = pneg %p46
        $region26: #{tpu_custom_call.1} parent=23 // pred_check_branch
          %149 = sbr.rel (%p147) target = $region28
        $region27: #{tpu_custom_call.1} parent=23 // pred_region
          %s150 = smul.u32 2, %s20
          %p151 = scmp.lt.s32.totalorder %s19, 1
          %s152 = scalar_select %p151, %s19, 1
          %p153 = scmp.lt.s32.totalorder %s150, 1
          %s154 = scalar_select %p153, %s150, 1
          %s155 = smul.addr %s152, 2
          %s156 = sadd.s32 %s154, %s155
          %s157 = smul.addr %s156, 4
          %s158 = scalar_lea.vmem %s0, %s157
          %s159 = smul.u32 2, %s20
        $region28: #{tpu_custom_call.1} parent=23 // pred_fallthru
          _
      $region24: #{tpu_custom_call.1} parent=5 // pred_fallthru
        _
      %p160 = scmp.le.s32.totalorder 1, %s12
      %p161 = scmp.lt.s32.totalorder %s12, 3
      %p162 = pnand %p160, %p161
      %p163 = pneg %p162
      // Predicated region
      $region29: #{tpu_custom_call.1} parent=5 // pred_check
        _
      $region30: #{tpu_custom_call.1} parent=5 // pred_check_branch
        %165 = sbr.rel (%p162) target = $region32
      $region31: #{tpu_custom_call.1} parent=5 // pred_region
        %s166 = ssub.s32 %s12, 1
        %s167 = smul.u32 2, %s22
        %p168 = scmp.lt.s32.totalorder %s21, 1
        %s169 = scalar_select %p168, %s21, 1
        %p170 = scmp.lt.s32.totalorder %s167, 1
        %s171 = scalar_select %p170, %s167, 1
        %s172 = smul.addr %s169, 2
        %s173 = sadd.s32 %s171, %s172
        %s174 = smul.addr %s173, 4
        %s175 = scalar_lea.vmem %s0, %s174
        %p176 = pneg %p52
        %p177 = pneg %p49
        %p178 = pneg %p73
        %p179 = pneg %p70
        %p180 = pneg %p94
        %p181 = pneg %p91
        %p182 = pneg %p122
        %p183 = pneg %p119
        %s184 = sand.u32 %s109, 1
        %s185 = scalar_lea.sflag [#allocation3], %s184
        %s186 = sand.u32 %s109, 1
        %s187 = smul.addr %s186, 16
        %s188 = scalar_lea.vmem [#allocation2], %s187
        %s189 = smul.u32 2, %s22
        %p190 = scmp.lt.s32.totalorder %s21, 1
        %s191 = scalar_select %p190, %s21, 1
        %p192 = scmp.lt.s32.totalorder %s189, 1
        %s193 = scalar_select %p192, %s189, 1
        %s194 = smul.addr %s191, 2
        %s195 = sadd.s32 %s193, %s194
        %s196 = smul.addr %s195, 4
        %s197 = scalar_lea.vmem %s0, %s196
        %s198 = smul.u32 2, %s22
        %s199 = smul.u32 2, %s22
        %v200 = vld [vmem:[%s1] sm:$0xff]
        %v201 = vld [vmem:[%s197] ss:$4 sm:$0x3]
        %203 = vset.pattern.permute.xlu0 0
        %204 = vperm.xlu0 %203, %v200
        %v205 = vpop.permute.xlu0 %204
        %v208 = vlaneseq
        %v209 = vshrl.u32 %v208, 7
        %v210 = vsub.s32 0, %v209
        %v211 = vrot.slane %v201, %v210
        %v212 = vlaneseq
        %v213 = vshrl.u32 %v212, 7
        %v214 = vsub.s32 1, %v213
        %v215 = vrot.slane %v201, %v214
        %v218 = vmul.f32 %v205, %v211
        %v219 = vmul.f32 %v205, %v215
        %v220 = vld [vmem:[%s2] sm:$0xff]
        %222 = vset.pattern.permute.xlu0 0
        %223 = vperm.xlu0 %222, %v220
        %v224 = vpop.permute.xlu0 %223
        %v226 = vadd.f32 %v218, %v224
        %v227 = vadd.f32 %v219, %v224
        %s228 = scalar_lea.vmem %s1, 8
        %v229 = vld [vmem:[%s228] sm:$0xff]
        %s230 = scalar_lea.vmem %s197, 1
        %v231 = vld [vmem:[%s230] ss:$4 sm:$0x3]
        %233 = vset.pattern.permute.xlu0 0
        %234 = vperm.xlu0 %233, %v229
        %v235 = vpop.permute.xlu0 %234
        %v238 = vlaneseq
        %v239 = vshrl.u32 %v238, 7
        %v240 = vsub.s32 0, %v239
        %v241 = vrot.slane %v231, %v240
        %v242 = vlaneseq
        %v243 = vshrl.u32 %v242, 7
        %v244 = vsub.s32 1, %v243
        %v245 = vrot.slane %v231, %v244
        %v248 = vmul.f32 %v235, %v241
        %v249 = vmul.f32 %v235, %v245
        %v250 = vadd.f32 %v226, %v248
        %v251 = vadd.f32 %v227, %v249
        %s252 = scalar_lea.vmem %s1, 16
        %v253 = vld [vmem:[%s252] sm:$0xff]
        %s254 = scalar_lea.vmem %s197, 2
        %v255 = vld [vmem:[%s254] ss:$4 sm:$0x3]
        %257 = vset.pattern.permute.xlu0 0
        %258 = vperm.xlu0 %257, %v253
        %v259 = vpop.permute.xlu0 %258
        %v262 = vlaneseq
        %v263 = vshrl.u32 %v262, 7
        %v264 = vsub.s32 0, %v263
        %v265 = vrot.slane %v255, %v264
        %v266 = vlaneseq
        %v267 = vshrl.u32 %v266, 7
        %v268 = vsub.s32 1, %v267
        %v269 = vrot.slane %v255, %v268
        %v272 = vmul.f32 %v259, %v265
        %v273 = vmul.f32 %v259, %v269
        %v274 = vadd.f32 %v250, %v272
        %v275 = vadd.f32 %v251, %v273
        %s276 = scalar_lea.vmem %s1, 24
        %v277 = vld [vmem:[%s276] sm:$0xff]
        %s278 = scalar_lea.vmem %s197, 3
        %v279 = vld [vmem:[%s278] ss:$4 sm:$0x3]
        %281 = vset.pattern.permute.xlu0 0
        %282 = vperm.xlu0 %281, %v277
        %v283 = vpop.permute.xlu0 %282
        %v286 = vlaneseq
        %v287 = vshrl.u32 %v286, 7
        %v288 = vsub.s32 0, %v287
        %v289 = vrot.slane %v279, %v288
        %v290 = vlaneseq
        %v291 = vshrl.u32 %v290, 7
        %v292 = vsub.s32 1, %v291
        %v293 = vrot.slane %v279, %v292
        %v296 = vmul.f32 %v283, %v289
        %v297 = vmul.f32 %v283, %v293
        %v298 = vadd.f32 %v274, %v296
        %v299 = vadd.f32 %v275, %v297
        %300 = vst [vmem:[%s188] sm:$0xff] %v298
        %301 = vst [vmem:[%s188 + $0x8] sm:$0xff] %v299
        %s302 = sand.u32 %s109, 1
        %s303 = scalar_lea.sflag [#allocation3], %s302
        %s304 = sand.u32 %s109, 1
        %s305 = smul.addr %s304, 16
        %s306 = scalar_lea.vmem [#allocation2], %s305
        // Predicated region
        $region33: #{tpu_custom_call.1} parent=31 // pred_check
          %p307 = pneg %p119
        $region34: #{tpu_custom_call.1} parent=31 // pred_check_branch
          %309 = sbr.rel (%p307) target = $region36
        $region35: #{tpu_custom_call.1} parent=31 // pred_region
          %s310 = smul.u32 2, %s22
          %s312 = ssub.s32 256, 256
          %313 = vsyncadd %s303, %s312
          %s314 = smul.addr %s21, 2
          %s315 = sadd.s32 %s310, %s314
          %s316 = smul.addr %s315, 128
          %s317 = scalar_lea.hbm %s3, %s316
          %s319 = sshll.u32 %s306, 4
          %s320 = int_to_ptr.vmem [resolvable:$true] %s319
          %322 = dma.vmem_to_hbm [thread:$0]  %s320, 256, %s317, %s303
        $region36: #{tpu_custom_call.1} parent=31 // pred_fallthru
          _
      $region32: #{tpu_custom_call.1} parent=5 // pred_fallthru
        _
      %p323 = scmp.le.s32.totalorder 2, %s12
      // Predicated region
      $region37: #{tpu_custom_call.1} parent=5 // pred_check
        %p324 = pneg %p323
      $region38: #{tpu_custom_call.1} parent=5 // pred_check_branch
        %326 = sbr.rel (%p324) target = $region40
      $region39: #{tpu_custom_call.1} parent=5 // pred_region
        %s327 = ssub.s32 %s12, 2
        // Predicated region
        $region41: #{tpu_custom_call.1} parent=39 // pred_check
          %p328 = pneg %p125
        $region42: #{tpu_custom_call.1} parent=39 // pred_check_branch
          %330 = sbr.rel (%p328) target = $region44
        $region43: #{tpu_custom_call.1} parent=39 // pred_region
          %s331 = sand.u32 %s110, 1
          %s332 = scalar_lea.sflag [#allocation3], %s331
          %s333 = sand.u32 %s110, 1
          %s334 = smul.addr %s333, 16
          %s335 = scalar_lea.vmem [#allocation2], %s334
          %336 = dma.done %s332, 256
        $region44: #{tpu_custom_call.1} parent=39 // pred_fallthru
          _
      $region40: #{tpu_custom_call.1} parent=5 // pred_fallthru
        _
    $region6: #{tpu_custom_call.1} parent=1 // loop_footer
      %s16 = sadd.s32 1, %s12
    $region7: #{tpu_custom_call.1} parent=1 // loop_footer_branch
      %11 = sbr.rel target = $region3
    $region8: #{tpu_custom_call.1} parent=1 // loop_exit
      _
    %337 = vsyncpa [#allocation3], 1
    %s338 = scalar_lea.sflag [#allocation3], 1
    %339 = vsyncpa %s338, 1

</llo_original>
